<compile_context>
chip_gen: v6e
topology: v6e:2x2x1
jax: 0.10.0
libtpu: 0.0.40
codegen_flags: <defaults>
</compile_context>

<pallas_src>
import jax
import jax.numpy as jnp
from jax.experimental import pallas as pl
from jax.experimental.pallas import tpu as pltpu


def _mlp_kernel(x_ref, w1_ref, b1_ref, w2_ref, b2_ref, o_ref):
    """Fused 2-layer MLP head on one batch tile: relu(x @ W1 + b1) @ W2 + b2."""
    # In-kernel cast: x arrives at its producer dtype (e.g. f32) and is cast to
    # the weight dtype right before the MXU.  This removes the wrapper-side
    # astype pass (a full extra HBM read+write over x).
    x = x_ref[...].astype(w1_ref.dtype)
    # Layer 1: MXU matmul with f32 accumulation; bias + ReLU on the VPU in f32
    # (v5e has no bf16 VPU, so keep elementwise work in f32).
    h = jnp.dot(x, w1_ref[...], preferred_element_type=jnp.float32)
    h = jnp.maximum(h + b1_ref[...], 0.0)
    # Layer 2: cast activations back to the weight dtype for the MXU.
    y = jnp.dot(h.astype(w2_ref.dtype), w2_ref[...],
                preferred_element_type=jnp.float32)
    o_ref[...] = (y + b2_ref[...]).astype(o_ref.dtype)
    # TODO(synk): dropout (dropout_prob > 0, training mode) not implemented;
    # the default / eval forward has no dropout so this matches forward().


def _round_up(x, m):
    return ((x + m - 1) // m) * m


def prepare_params(w1, b1, w2, b2, *, use_bf16=True):
    """One-time parameter prep, hoisted out of the per-call path.

    Casts weights to bf16 for the MXU (biases stay f32 for the VPU).  Call once
    and reuse across forward calls so there is no per-call convert traffic.
    """
    wdt = jnp.bfloat16 if use_bf16 else jnp.float32
    return (w1.astype(wdt), b1.astype(jnp.float32),
            w2.astype(wdt), b2.astype(jnp.float32))


def classifier_head_forward(x, w1, b1, w2, b2, *, block_b=512):
    """x: [B, in_dim]; w1: [in_dim, H]; b1: [1, H]; w2: [H, out]; b2: [1, out].

    Returns [B, out] in x.dtype.  One hidden layer (hidden_dims=[H]).
    # TODO(synk): arbitrary-depth hidden_dims (>1 hidden layer) would need a
    # generated kernel / chained calls; the common single-hidden probe is fused.
    """
    B, IN = x.shape
    H = w1.shape[1]
    OUT = w2.shape[1]
    out_dtype = x.dtype

    # --- Batch tile: always a multiple of 16 sublanes (legal for f32 and bf16
    # inputs, even if block_b is odd), capped by block_b, and capped so the
    # grid has >= 2 steps when B allows it (both TensorCores busy on v7x).
    ALIGN = 16
    tb = min(block_b, _round_up(pl.cdiv(B, 2), ALIGN))
    TB = max(ALIGN, (tb // ALIGN) * ALIGN)
    grid = (pl.cdiv(B, TB),)  # ragged last block: reads padded, writes masked.

    # --- VMEM budget: double-buffered x/out tiles, single-buffered weights,
    # plus headroom for in-kernel f32 temporaries. Clamp to [32 MiB, 64 MiB]
    # (>= default scoped limit on v5e, <= physical VMEM per TC on v7x).
    x_isz = jnp.dtype(x.dtype).itemsize
    o_isz = jnp.dtype(out_dtype).itemsize
    w_bytes = sum(int(a.size) * jnp.dtype(a.dtype).itemsize
                  for a in (w1, b1, w2, b2))
    vmem_est = (2 * TB * IN * x_isz + 2 * TB * OUT * o_isz + w_bytes
                + 6 * TB * max(IN, H, OUT) * 4)
    vmem_limit = int(min(64 * 2**20, max(32 * 2**20, 2 * vmem_est)))

    cost = pl.CostEstimate(
        flops=2 * B * (IN * H + H * OUT),
        transcendentals=0,
        bytes_accessed=B * IN * x_isz + w_bytes + B * OUT * o_isz,
    )

    # Weights/biases: constant index map -> stay VMEM-resident; single buffer.
    resident = pl.Buffered(1)

    y = pl.pallas_call(
        _mlp_kernel,
        out_shape=jax.ShapeDtypeStruct((B, OUT), out_dtype),
        grid_spec=pl.GridSpec(
            grid=grid,
            in_specs=[
                # x: tiled over the batch -> pipelined HBM<->VMEM tiles.
                pl.BlockSpec((TB, IN), lambda i: (i, 0)),
                pl.BlockSpec(w1.shape, lambda i: (0, 0), pipeline_mode=resident),
                pl.BlockSpec(b1.shape, lambda i: (0, 0), pipeline_mode=resident),
                pl.BlockSpec(w2.shape, lambda i: (0, 0), pipeline_mode=resident),
                pl.BlockSpec(b2.shape, lambda i: (0, 0), pipeline_mode=resident),
            ],
            # Full last-dim output block: no lane padding, contiguous writeback.
            out_specs=pl.BlockSpec((TB, OUT), lambda i: (i, 0)),
        ),
        compiler_params=pltpu.CompilerParams(
            # Independent batch tiles -> sharded across both TCs on v7x,
            # harmless on single-TC v5e/v6e.
            dimension_semantics=("parallel",),
            vmem_limit_bytes=vmem_limit,
        ),
        cost_estimate=cost,
    )(x, w1, b1, w2, b2)

    return y


def init_params(key, input_dim, hidden_dim, output_dim, dtype=jnp.float32):
    """Deterministic init mimicking torch.nn.Linear (uniform +/- 1/sqrt(fan_in)).

    Weights are stored already transposed to [in_dim, out_dim]."""
    k1, k2, k3, k4 = jax.random.split(key, 4)
    bound1 = 1.0 / (input_dim ** 0.5)
    bound2 = 1.0 / (hidden_dim ** 0.5)
    w1 = jax.random.uniform(k1, (input_dim, hidden_dim), dtype, -bound1, bound1)
    b1 = jax.random.uniform(k2, (1, hidden_dim), dtype, -bound1, bound1)
    w2 = jax.random.uniform(k3, (hidden_dim, output_dim), dtype, -bound2, bound2)
    b2 = jax.random.uniform(k4, (1, output_dim), dtype, -bound2, bound2)
    return w1, b1, w2, b2


if __name__ == "__main__":
    # ClassifierHead(input_dim=32, output_dim=16, hidden_dims=[64]).
    # B=40 with block_b=16 exercises a multi-step pipelined grid (3 tiles)
    # and a ragged last block (rows 32..39 valid) masked by Pallas.
    B, IN, H, OUT = 40, 32, 64, 16

    key = jax.random.PRNGKey(0)
    kx, kp = jax.random.split(key)
    x = jax.random.normal(kx, (B, IN), dtype=jnp.float32)
    w1, b1, w2, b2 = init_params(kp, IN, H, OUT)

    # bf16 MXU path; weights cast once, outside the per-call path.
    w1b, b1f, w2b, b2f = prepare_params(w1, b1, w2, b2, use_bf16=True)
    y = jax.block_until_ready(
        classifier_head_forward(x, w1b, b1f, w2b, b2f, block_b=16))
    assert y.shape == (B, OUT)
    assert y.dtype == x.dtype

    # Reference with the same bf16 operand / f32 accumulation recipe (tight).
    xb = x.astype(jnp.bfloat16)
    h_ref = jnp.maximum(
        jnp.dot(xb, w1b, preferred_element_type=jnp.float32) + b1f, 0.0)
    y_ref_bf16 = jnp.dot(h_ref.astype(jnp.bfloat16), w2b,
                         preferred_element_type=jnp.float32) + b2f
    assert jnp.allclose(y, y_ref_bf16, atol=1e-4, rtol=1e-4)

    # Pure-f32 module semantics (loose: bf16 operand rounding only).
    y_ref_f32 = jnp.maximum(x @ w1 + b1, 0.0) @ w2 + b2
    assert jnp.allclose(y, y_ref_f32, atol=1e-1, rtol=1e-1)

    # Exact-f32 path (use_bf16=False) for consumers needing f32 parity.
    w1f, b1f2, w2f, b2f2 = prepare_params(w1, b1, w2, b2, use_bf16=False)
    y_f32 = jax.block_until_ready(
        classifier_head_forward(x, w1f, b1f2, w2f, b2f2, block_b=16))
    assert y_f32.shape == (B, OUT)
    assert jnp.allclose(y_f32, y_ref_f32, atol=1e-2, rtol=1e-2)

    print("KERNEL_OK")
</pallas_src>

<mosaic_0001>
module attributes {stable_mosaic.version = 11 : i64} {
  func.func @_mlp_kernel(%arg0: i32, %arg1: memref<16x32xf32, #tpu.memory_space<vmem>>, %arg2: memref<32x64xbf16, #tpu.memory_space<vmem>>, %arg3: memref<1x64xf32, #tpu.memory_space<vmem>>, %arg4: memref<64x16xbf16, #tpu.memory_space<vmem>>, %arg5: memref<1x16xf32, #tpu.memory_space<vmem>>, %arg6: memref<16x16xf32, #tpu.memory_space<vmem>>) attributes {dimension_semantics = [#tpu.dimension_semantics<parallel>], iteration_bounds = array<i64: 3>, scalar_prefetch = 0 : i64, scratch_operands = 0 : i64, tpu.core_type = #tpu.core_type<tc>, window_params = [{transform_indices = @transform_0, window_bounds = array<i64: 16, 32>}, {pipeline_mode = #tpu.pipeline_mode<synchronous>, transform_indices = @transform_1, window_bounds = array<i64: 32, 64>}, {pipeline_mode = #tpu.pipeline_mode<synchronous>, transform_indices = @transform_2, window_bounds = array<i64: 1, 64>}, {pipeline_mode = #tpu.pipeline_mode<synchronous>, transform_indices = @transform_3, window_bounds = array<i64: 64, 16>}, {pipeline_mode = #tpu.pipeline_mode<synchronous>, transform_indices = @transform_4, window_bounds = array<i64: 1, 16>}, {transform_indices = @transform_5, window_bounds = array<i64: 16, 16>}]} {
    %c0 = arith.constant 0 : index
    %c0_0 = arith.constant 0 : index
    %0 = vector.load %arg1[%c0, %c0_0] : memref<16x32xf32, #tpu.memory_space<vmem>>, vector<16x32xf32>
    %1 = arith.truncf %0 : vector<16x32xf32> to vector<16x32xbf16>
    %c0_1 = arith.constant 0 : index
    %c0_2 = arith.constant 0 : index
    %2 = vector.load %arg2[%c0_1, %c0_2] : memref<32x64xbf16, #tpu.memory_space<vmem>>, vector<32x64xbf16>
    %cst = arith.constant dense<0.000000e+00> : vector<16x64xf32>
    %3 = tpu.matmul %1, %2, %cst {dimension_numbers = #tpu.dot_dimension_numbers<[1], [0], [0], [1], [0, 0, 1, 1], [], []>} : vector<16x32xbf16>, vector<32x64xbf16>, vector<16x64xf32> -> vector<16x64xf32>
    %c0_3 = arith.constant 0 : index
    %c0_4 = arith.constant 0 : index
    %4 = vector.load %arg3[%c0_3, %c0_4] : memref<1x64xf32, #tpu.memory_space<vmem>>, vector<1x64xf32>
    %5 = vector.broadcast %4 : vector<1x64xf32> to vector<16x64xf32>
    %6 = arith.addf %3, %5 : vector<16x64xf32>
    %cst_5 = arith.constant 0.000000e+00 : f32
    %7 = vector.broadcast %cst_5 : f32 to vector<16x64xf32>
    %8 = arith.maximumf %6, %7 : vector<16x64xf32>
    %9 = arith.truncf %8 : vector<16x64xf32> to vector<16x64xbf16>
    %c0_6 = arith.constant 0 : index
    %c0_7 = arith.constant 0 : index
    %10 = vector.load %arg4[%c0_6, %c0_7] : memref<64x16xbf16, #tpu.memory_space<vmem>>, vector<64x16xbf16>
    %cst_8 = arith.constant dense<0.000000e+00> : vector<16x16xf32>
    %11 = tpu.matmul %9, %10, %cst_8 {dimension_numbers = #tpu.dot_dimension_numbers<[1], [0], [0], [1], [0, 0, 1, 1], [], []>} : vector<16x64xbf16>, vector<64x16xbf16>, vector<16x16xf32> -> vector<16x16xf32>
    %c0_9 = arith.constant 0 : index
    %c0_10 = arith.constant 0 : index
    %12 = vector.load %arg5[%c0_9, %c0_10] : memref<1x16xf32, #tpu.memory_space<vmem>>, vector<1x16xf32>
    %13 = vector.broadcast %12 : vector<1x16xf32> to vector<16x16xf32>
    %14 = arith.addf %11, %13 : vector<16x16xf32>
    %c0_11 = arith.constant 0 : index
    %c0_12 = arith.constant 0 : index
    %15 = vector.load %arg6[%c0_11, %c0_12] : memref<16x16xf32, #tpu.memory_space<vmem>>, vector<16x16xf32>
    tpu.vector_store %arg6[%c0_11, %c0_12], %14 {strides = array<i32>} : memref<16x16xf32, #tpu.memory_space<vmem>>, vector<16x16xf32>,
    return
  }
  func.func @transform_0(%arg0: i32) -> (i32, i32) {
    %c0_i32 = arith.constant 0 : i32
    %c0_i32_0 = arith.constant 0 : i32
    return %arg0, %c0_i32 : i32, i32
  }
  func.func @transform_1(%arg0: i32) -> (i32, i32) {
    %c0_i32 = arith.constant 0 : i32
    %c0_i32_0 = arith.constant 0 : i32
    %c0_i32_1 = arith.constant 0 : i32
    return %c0_i32, %c0_i32_0 : i32, i32
  }
  func.func @transform_2(%arg0: i32) -> (i32, i32) {
    %c0_i32 = arith.constant 0 : i32
    %c0_i32_0 = arith.constant 0 : i32
    %c0_i32_1 = arith.constant 0 : i32
    return %c0_i32, %c0_i32_0 : i32, i32
  }
  func.func @transform_3(%arg0: i32) -> (i32, i32) {
    %c0_i32 = arith.constant 0 : i32
    %c0_i32_0 = arith.constant 0 : i32
    %c0_i32_1 = arith.constant 0 : i32
    return %c0_i32, %c0_i32_0 : i32, i32
  }
  func.func @transform_4(%arg0: i32) -> (i32, i32) {
    %c0_i32 = arith.constant 0 : i32
    %c0_i32_0 = arith.constant 0 : i32
    %c0_i32_1 = arith.constant 0 : i32
    return %c0_i32, %c0_i32_0 : i32, i32
  }
  func.func @transform_5(%arg0: i32) -> (i32, i32) {
    %c0_i32 = arith.constant 0 : i32
    %c0_i32_0 = arith.constant 0 : i32
    return %arg0, %c0_i32 : i32, i32
  }
}

</mosaic_0001>

<llo_original>
// kernel: tpu_custom_call.1
$region0: #{tpu_custom_call.1}
  #allocation0 [shape = 'u32[]', space=smem, size = 0x4, offset = 0x4, fixed_abs, tag = 'smem constant byte address 0x4 - core index']
  #allocation1 [shape = 'u32[144,128]{1,0:T(1,128)}', space=vmem, size = 0x12000, scoped, tag = 'internal scratch']
  %s0 = inlined_call_operand.vmem [shape: f32[40,32], index: 0, kind: input, shape index: {}]
  %s1 = inlined_call_operand.vmem [shape: bf16[32,64], index: 1, kind: input, shape index: {}]
  %s2 = inlined_call_operand.vmem [shape: f32[1,64], index: 2, kind: input, shape index: {}]
  %s3 = inlined_call_operand.vmem [shape: bf16[64,16], index: 3, kind: input, shape index: {}]
  %s4 = inlined_call_operand.vmem [shape: f32[1,16], index: 4, kind: input, shape index: {}]
  %s5 = inlined_call_operand.vmem [shape: f32[40,16], index: 5, kind: output, shape index: {}]
  %s6 = sld [smem:[#allocation0]]
  $region101: #{tpu_custom_call.1} parent=0
    _
  %s8 = ssub.s32 1, %s6
  %s9 = scalar_select 0, %s8, %s6
  $region1: #{tpu_custom_call.1} parent=0
    #allocation2 [shape = 'u8[16384]{0}', space=vmem, size = 0x4000, scoped, tag = 'output window, operand 0']
    loop: start=0, step=1, limit=5
    $region2: #{tpu_custom_call.1} parent=1 // loop_pre_header
      _
    $region3: #{tpu_custom_call.1} parent=1 // loop_header
      %s11 = sphi 0, %s15
      %p12 = scmp.ge.s32.totalorder %s11, 5
      %s21 = sphi 0, %s23
      %s24 = sphi 0, %s21
      %s25 = sphi 0, %s24
      %s41 = sphi 0, %s25
      %s45 = sphi 0, %s45
      %s47 = sphi 0, %s45
      %s48 = sphi 0, %s47
      %s62 = sphi 0, %s48
      %s66 = sphi 0, %s66
      %s68 = sphi 0, %s66
      %s69 = sphi 0, %s68
      %s83 = sphi 0, %s69
      %s87 = sphi 0, %s87
      %s89 = sphi 0, %s87
      %s90 = sphi 0, %s89
      %s104 = sphi 0, %s90
      %s108 = sphi 0, %s108
      %s110 = sphi 0, %s108
      %s111 = sphi 0, %s110
      %s125 = sphi 0, %s111
      %s131 = sphi 0, %s133
      %s134 = sphi 0, %s131
      %s135 = sphi 0, %s134
      %s151 = sphi 0, %s135
    $region4: #{tpu_custom_call.1} parent=1 // loop_header_branch
      %14 = sbr.rel (%p12) target = $region8
    $region5: #{tpu_custom_call.1} parent=1 // loop_body
      %s16 = ssub.s32 %s11, 1
      %s17 = ssub.s32 %s11, 2
      %s18 = sadd.s32 %s11, 1
      %s19 = ssub.s32 %s11, %s18
      %p20 = scmp.eq.s32.totalorder %s19, 0
      %s22 = sadd.s32 %s21, 1
      %s23 = scalar_select %p20, %s21, %s22
      %p26 = pneg %p20
      %p27 = scmp.eq.s32.totalorder %s11, 2
      %p28 = por %p26, %p27
      %p29 = scmp.ne.s32.totalorder %s21, %s24
      %p30 = scmp.eq.s32.totalorder %s11, 0
      %p31 = por %p29, %p30
      %p32 = scmp.ne.s32.totalorder %s21, %s24
      %p33 = scmp.eq.s32.totalorder %s16, 2
      %p34 = por %p32, %p33
      %p35 = scmp.ne.s32.totalorder %s24, %s25
      %p36 = scmp.eq.s32.totalorder %s16, 0
      %p37 = por %p35, %p36
      %p38 = scmp.ne.s32.totalorder %s24, %s25
      %p39 = scmp.eq.s32.totalorder %s17, 2
      %p40 = por %p38, %p39
      %p42 = scmp.ne.s32.totalorder %s25, %s41
      %p43 = scmp.eq.s32.totalorder %s17, 0
      %p44 = por %p42, %p43
      %s46 = sadd.s32 %s45, 1
      %p49 = scmp.eq.s32.totalorder %s11, 2
      %p50 = scmp.ne.s32.totalorder %s45, %s47
      %p51 = scmp.eq.s32.totalorder %s11, 0
      %p52 = por %p50, %p51
      %p53 = scmp.ne.s32.totalorder %s45, %s47
      %p54 = scmp.eq.s32.totalorder %s16, 2
      %p55 = por %p53, %p54
      %p56 = scmp.ne.s32.totalorder %s47, %s48
      %p57 = scmp.eq.s32.totalorder %s16, 0
      %p58 = por %p56, %p57
      %p59 = scmp.ne.s32.totalorder %s47, %s48
      %p60 = scmp.eq.s32.totalorder %s17, 2
      %p61 = por %p59, %p60
      %p63 = scmp.ne.s32.totalorder %s48, %s62
      %p64 = scmp.eq.s32.totalorder %s17, 0
      %p65 = por %p63, %p64
      %s67 = sadd.s32 %s66, 1
      %p70 = scmp.eq.s32.totalorder %s11, 2
      %p71 = scmp.ne.s32.totalorder %s66, %s68
      %p72 = scmp.eq.s32.totalorder %s11, 0
      %p73 = por %p71, %p72
      %p74 = scmp.ne.s32.totalorder %s66, %s68
      %p75 = scmp.eq.s32.totalorder %s16, 2
      %p76 = por %p74, %p75
      %p77 = scmp.ne.s32.totalorder %s68, %s69
      %p78 = scmp.eq.s32.totalorder %s16, 0
      %p79 = por %p77, %p78
      %p80 = scmp.ne.s32.totalorder %s68, %s69
      %p81 = scmp.eq.s32.totalorder %s17, 2
      %p82 = por %p80, %p81
      %p84 = scmp.ne.s32.totalorder %s69, %s83
      %p85 = scmp.eq.s32.totalorder %s17, 0
      %p86 = por %p84, %p85
      %s88 = sadd.s32 %s87, 1
      %p91 = scmp.eq.s32.totalorder %s11, 2
      %p92 = scmp.ne.s32.totalorder %s87, %s89
      %p93 = scmp.eq.s32.totalorder %s11, 0
      %p94 = por %p92, %p93
      %p95 = scmp.ne.s32.totalorder %s87, %s89
      %p96 = scmp.eq.s32.totalorder %s16, 2
      %p97 = por %p95, %p96
      %p98 = scmp.ne.s32.totalorder %s89, %s90
      %p99 = scmp.eq.s32.totalorder %s16, 0
      %p100 = por %p98, %p99
      %p101 = scmp.ne.s32.totalorder %s89, %s90
      %p102 = scmp.eq.s32.totalorder %s17, 2
      %p103 = por %p101, %p102
      %p105 = scmp.ne.s32.totalorder %s90, %s104
      %p106 = scmp.eq.s32.totalorder %s17, 0
      %p107 = por %p105, %p106
      %s109 = sadd.s32 %s108, 1
      %p112 = scmp.eq.s32.totalorder %s11, 2
      %p113 = scmp.ne.s32.totalorder %s108, %s110
      %p114 = scmp.eq.s32.totalorder %s11, 0
      %p115 = por %p113, %p114
      %p116 = scmp.ne.s32.totalorder %s108, %s110
      %p117 = scmp.eq.s32.totalorder %s16, 2
      %p118 = por %p116, %p117
      %p119 = scmp.ne.s32.totalorder %s110, %s111
      %p120 = scmp.eq.s32.totalorder %s16, 0
      %p121 = por %p119, %p120
      %p122 = scmp.ne.s32.totalorder %s110, %s111
      %p123 = scmp.eq.s32.totalorder %s17, 2
      %p124 = por %p122, %p123
      %p126 = scmp.ne.s32.totalorder %s111, %s125
      %p127 = scmp.eq.s32.totalorder %s17, 0
      %p128 = por %p126, %p127
      %s129 = ssub.s32 %s11, %s18
      %p130 = scmp.eq.s32.totalorder %s129, 0
      %s132 = sadd.s32 %s131, 1
      %s133 = scalar_select %p130, %s131, %s132
      %p136 = pneg %p130
      %p137 = scmp.eq.s32.totalorder %s11, 2
      %p138 = por %p136, %p137
      %p139 = scmp.ne.s32.totalorder %s131, %s134
      %p140 = scmp.eq.s32.totalorder %s11, 0
      %p141 = por %p139, %p140
      %p142 = scmp.ne.s32.totalorder %s131, %s134
      %p143 = scmp.eq.s32.totalorder %s16, 2
      %p144 = por %p142, %p143
      %p145 = scmp.ne.s32.totalorder %s134, %s135
      %p146 = scmp.eq.s32.totalorder %s16, 0
      %p147 = por %p145, %p146
      %p148 = scmp.ne.s32.totalorder %s134, %s135
      %p149 = scmp.eq.s32.totalorder %s17, 2
      %p150 = por %p148, %p149
      %p152 = scmp.ne.s32.totalorder %s135, %s151
      %p153 = scmp.eq.s32.totalorder %s17, 0
      %p154 = por %p152, %p153
      %p155 = scmp.le.s32.totalorder 1, %s11
      %p156 = scmp.lt.s32.totalorder %s11, 4
      %p157 = pnand %p155, %p156
      %p158 = pneg %p157
      // Predicated region
      $region9: #{tpu_custom_call.1} parent=5 // pred_check
        _
      $region10: #{tpu_custom_call.1} parent=5 // pred_check_branch
        %160 = sbr.rel (%p157) target = $region12
      $region11: #{tpu_custom_call.1} parent=5 // pred_region
        %s161 = ssub.s32 %s11, 1
        // Predicated region
        $region13: #{tpu_custom_call.1} parent=11 // pred_check
          %p162 = pneg %p58
        $region14: #{tpu_custom_call.1} parent=11 // pred_check_branch
          %164 = sbr.rel (%p162) target = $region16
        $region15: #{tpu_custom_call.1} parent=11 // pred_region
          _
        $region16: #{tpu_custom_call.1} parent=11 // pred_fallthru
          _
        // Predicated region
        $region17: #{tpu_custom_call.1} parent=11 // pred_check
          %p165 = pneg %p79
        $region18: #{tpu_custom_call.1} parent=11 // pred_check_branch
          %167 = sbr.rel (%p165) target = $region20
        $region19: #{tpu_custom_call.1} parent=11 // pred_region
          _
        $region20: #{tpu_custom_call.1} parent=11 // pred_fallthru
          _
        // Predicated region
        $region21: #{tpu_custom_call.1} parent=11 // pred_check
          %p168 = pneg %p100
        $region22: #{tpu_custom_call.1} parent=11 // pred_check_branch
          %170 = sbr.rel (%p168) target = $region24
        $region23: #{tpu_custom_call.1} parent=11 // pred_region
          _
        $region24: #{tpu_custom_call.1} parent=11 // pred_fallthru
          _
        // Predicated region
        $region25: #{tpu_custom_call.1} parent=11 // pred_check
          %p171 = pneg %p121
        $region26: #{tpu_custom_call.1} parent=11 // pred_check_branch
          %173 = sbr.rel (%p171) target = $region28
        $region27: #{tpu_custom_call.1} parent=11 // pred_region
          _
        $region28: #{tpu_custom_call.1} parent=11 // pred_fallthru
          _
      $region12: #{tpu_custom_call.1} parent=5 // pred_fallthru
        _
      %p174 = scmp.lt.s32.totalorder %s11, 3
      // Predicated region
      $region29: #{tpu_custom_call.1} parent=5 // pred_check
        %p175 = pneg %p174
      $region30: #{tpu_custom_call.1} parent=5 // pred_check_branch
        %177 = sbr.rel (%p175) target = $region32
      $region31: #{tpu_custom_call.1} parent=5 // pred_region
        // Predicated region
        $region33: #{tpu_custom_call.1} parent=31 // pred_check
          %p178 = pneg %p31
        $region34: #{tpu_custom_call.1} parent=31 // pred_check_branch
          %180 = sbr.rel (%p178) target = $region36
        $region35: #{tpu_custom_call.1} parent=31 // pred_region
          %s181 = smul.u32 2, %s11
          %s182 = ssub.s32 5, %s181
          %p183 = scmp.lt.s32.totalorder %s182, 2
          %s184 = scalar_select %p183, %s182, 2
          %s185 = smul.u32 128, %s184
          %p186 = scmp.lt.s32.totalorder %s181, 4
          %s187 = scalar_select %p186, %s181, 4
          %s188 = smul.addr %s187, 8
          %s189 = scalar_lea.vmem %s0, %s188
          %s190 = smul.u32 2, %s11
          %s191 = ssub.s32 5, %s190
          %p192 = scmp.lt.s32.totalorder %s191, 2
          %s193 = scalar_select %p192, %s191, 2
          %s194 = smul.u32 128, %s193
        $region36: #{tpu_custom_call.1} parent=31 // pred_fallthru
          _
      $region32: #{tpu_custom_call.1} parent=5 // pred_fallthru
        _
      %p195 = scmp.le.s32.totalorder 1, %s11
      %p196 = scmp.lt.s32.totalorder %s11, 4
      %p197 = pnand %p195, %p196
      %p198 = pneg %p197
      // Predicated region
      $region37: #{tpu_custom_call.1} parent=5 // pred_check
        _
      $region38: #{tpu_custom_call.1} parent=5 // pred_check_branch
        %200 = sbr.rel (%p197) target = $region40
      $region39: #{tpu_custom_call.1} parent=5 // pred_region
        %s201 = ssub.s32 %s11, 1
        %s202 = smul.u32 2, %s16
        %s203 = ssub.s32 5, %s202
        %p204 = scmp.lt.s32.totalorder %s203, 2
        %s205 = scalar_select %p204, %s203, 2
        %s206 = smul.u32 128, %s205
        %p207 = scmp.lt.s32.totalorder %s202, 4
        %s208 = scalar_select %p207, %s202, 4
        %s209 = smul.addr %s208, 8
        %s210 = scalar_lea.vmem %s0, %s209
        %p211 = pneg %p37
        %p212 = pneg %p34
        %p213 = pneg %p58
        %p214 = pneg %p55
        %p215 = pneg %p79
        %p216 = pneg %p76
        %p217 = pneg %p100
        %p218 = pneg %p97
        %p219 = pneg %p121
        %p220 = pneg %p118
        %p221 = pneg %p147
        %p222 = pneg %p144
        %s223 = sand.u32 %s134, 1
        %s224 = sand.u32 %s134, 1
        %s225 = smul.addr %s224, 16
        %s226 = scalar_lea.vmem [#allocation2], %s225
        %s227 = smul.u32 2, %s16
        %s228 = ssub.s32 5, %s227
        %p229 = scmp.lt.s32.totalorder %s228, 2
        %s230 = scalar_select %p229, %s228, 2
        %s231 = smul.u32 128, %s230
        %p232 = scmp.lt.s32.totalorder %s227, 4
        %s233 = scalar_select %p232, %s227, 4
        %s234 = smul.addr %s233, 8
        %s235 = scalar_lea.vmem %s0, %s234
        %s236 = smul.u32 2, %s16
        %s237 = ssub.s32 5, %s236
        %p238 = scmp.lt.s32.totalorder %s237, 2
        %s239 = scalar_select %p238, %s237, 2
        %s240 = smul.u32 128, %s239
        %s241 = smul.u32 2, %s16
        %s242 = ssub.s32 5, %s241
        %p243 = scmp.lt.s32.totalorder %s242, 2
        %s244 = scalar_select %p243, %s242, 2
        %s245 = smul.u32 128, %s244
        %v247 = vld [vmem:[%s235] sm:$0xff]
        %v248 = vld [vmem:[%s235 + $0x8] sm:$0xff]
        %v249 = vpack.c.bf16 %v248, %v247
        %v250 = vld [vmem:[%s1] sm:$0xf]
        %v251 = vld [vmem:[%s1 + $0x4] sm:$0xf]
        %v252 = vld [vmem:[%s1 + $0x8] sm:$0xf]
        %v253 = vld [vmem:[%s1 + $0xc] sm:$0xf]
        %v254 = vld [vmem:[%s2] sm:$0x1]
        %v256 = vlaneseq
        %v257 = vshrl.u32 %v256, 7
        %v258 = vsub.s32 0, %v257
        %v259 = vrot.slane %v254, %v258
        %v265 = vunpack.c.l.b16 %v250
        %v266 = vunpack.c.l.b16 %v251
        %v267 = vunpack.c.l.b16 %v252
        %v268 = vunpack.c.l.b16 %v253
        %v269 = vpack.c.b16 %v266, %v265
        %v270 = vpack.c.b16 %v268, %v267
        %vm273 = vcmask 261120
        %v275 = vsel %vm273, %v249, 0
        %277 = vmatprep.subr.bf16.mxu0 0
        %278 = vmatpush1.bf16.msra.mxu0 0
        %279 = vmatprep.subr.bf16.mxu0 0
        %280 = vmatpush1.bf16.msra.mxu0 0
        %281 = vmatprep.subr.bf16.mxu0 0
        %282 = vmatpush1.bf16.msra.mxu0 0
        %283 = vmatprep.subr.bf16.mxu0 0
        %284 = vmatpush1.bf16.msra.mxu0 0
        %285 = vmatprep.subr.bf16.mxu0 0
        %286 = vmatpush1.bf16.msra.mxu0 0
        %287 = vmatprep.subr.bf16.mxu0 0
        %288 = vmatpush1.bf16.msra.mxu0 0
        %289 = vmatprep.subr.bf16.mxu0 0
        %290 = vmatpush1.bf16.msra.mxu0 %v270
        %291 = vmatprep.subr.bf16.mxu0 0
        %292 = vmatpush1.bf16.msra.mxu0 %v269
        %293 = vmatprep.subr.bf16.mxu0 0
        %294 = vmatpush2.bf16.msra.mxu0 0
        %295 = vmatprep.subr.bf16.mxu0 0
        %296 = vmatpush2.bf16.msra.mxu0 0
        %297 = vmatprep.subr.bf16.mxu0 0
        %298 = vmatpush2.bf16.msra.mxu0 0
        %299 = vmatprep.subr.bf16.mxu0 0
        %300 = vmatpush2.bf16.msra.mxu0 0
        %301 = vmatprep.subr.bf16.mxu0 0
        %302 = vmatpush2.bf16.msra.mxu0 0
        %303 = vmatprep.subr.bf16.mxu0 0
        %304 = vmatpush2.bf16.msra.mxu0 0
        %305 = vmatprep.subr.bf16.mxu0 0
        %306 = vmatpush2.bf16.msra.mxu0 0
        %307 = vmatprep.subr.bf16.mxu0 0
        %308 = vmatpush2.bf16.msra.mxu0 0
        %309 = vmatprep.mubr.bf16.mxu0 0
        %310 = vmatmul.mubr.bf16.gmra.mxu0 %v275
        %v311 = vpop.f32.mrf.mxu0
        %v312 = vadd.f32 %v259, %v311
        %v313 = vpop.f32.mrf.mxu0
        %v314 = vpop.f32.mrf.mxu0
        %v315 = vadd.f32 %v259, %v314
        %v316 = vpop.f32.mrf.mxu0
        %317 = vdwg.mxu0
        %v318 = vmax.f32 %v312, 0.0
        %v319 = vmax.f32 %v315, 0.0
        %v320 = vpack.c.bf16 %v319, %v318
        %v321 = vld [vmem:[%s3] sm:$0xf]
        %v322 = vld [vmem:[%s3 + $0x4] sm:$0xf]
        %v323 = vld [vmem:[%s3 + $0x8] sm:$0xf]
        %v324 = vld [vmem:[%s3 + $0xc] sm:$0xf]
        %v325 = vld [vmem:[%s3 + $0x10] sm:$0xf]
        %v326 = vld [vmem:[%s3 + $0x14] sm:$0xf]
        %v327 = vld [vmem:[%s3 + $0x18] sm:$0xf]
        %v328 = vld [vmem:[%s3 + $0x1c] sm:$0xf]
        %v329 = vld [vmem:[%s4] sm:$0x1]
        %v331 = vlaneseq
        %v332 = vshrl.u32 %v331, 7
        %v333 = vsub.s32 0, %v332
        %v334 = vrot.slane %v329, %v333
        %v344 = vunpack.c.l.b16 %v321
        %v345 = vunpack.c.l.b16 %v322
        %v346 = vunpack.c.l.b16 %v323
        %v347 = vunpack.c.l.b16 %v324
        %v348 = vunpack.c.l.b16 %v325
        %v349 = vunpack.c.l.b16 %v326
        %v350 = vunpack.c.l.b16 %v327
        %v351 = vunpack.c.l.b16 %v328
        %v352 = vpack.c.b16 %v345, %v344
        %v353 = vpack.c.b16 %v347, %v346
        %v354 = vpack.c.b16 %v349, %v348
        %v355 = vpack.c.b16 %v351, %v350
        %vm360 = vcmask 523264
        %v362 = vsel %vm360, %v320, 0
        %364 = vmatprep.subr.bf16.mxu0 0
        %365 = vmatpush1.bf16.msra.mxu0 0
        %366 = vmatprep.subr.bf16.mxu0 0
        %367 = vmatpush1.bf16.msra.mxu0 0
        %368 = vmatprep.subr.bf16.mxu0 0
        %369 = vmatpush1.bf16.msra.mxu0 0
        %370 = vmatprep.subr.bf16.mxu0 0
        %371 = vmatpush1.bf16.msra.mxu0 0
        %372 = vmatprep.subr.bf16.mxu0 0
        %373 = vmatpush1.bf16.msra.mxu0 %v355
        %374 = vmatprep.subr.bf16.mxu0 0
        %375 = vmatpush1.bf16.msra.mxu0 %v354
        %376 = vmatprep.subr.bf16.mxu0 0
        %377 = vmatpush1.bf16.msra.mxu0 %v353
        %378 = vmatprep.subr.bf16.mxu0 0
        %379 = vmatpush1.bf16.msra.mxu0 %v352
        %380 = vmatprep.subr.bf16.mxu0 0
        %381 = vmatpush2.bf16.msra.mxu0 0
        %382 = vmatprep.subr.bf16.mxu0 0
        %383 = vmatpush2.bf16.msra.mxu0 0
        %384 = vmatprep.subr.bf16.mxu0 0
        %385 = vmatpush2.bf16.msra.mxu0 0
        %386 = vmatprep.subr.bf16.mxu0 0
        %387 = vmatpush2.bf16.msra.mxu0 0
        %388 = vmatprep.subr.bf16.mxu0 0
        %389 = vmatpush2.bf16.msra.mxu0 0
        %390 = vmatprep.subr.bf16.mxu0 0
        %391 = vmatpush2.bf16.msra.mxu0 0
        %392 = vmatprep.subr.bf16.mxu0 0
        %393 = vmatpush2.bf16.msra.mxu0 0
        %394 = vmatprep.subr.bf16.mxu0 0
        %395 = vmatpush2.bf16.msra.mxu0 0
        %396 = vmatprep.mubr.bf16.mxu0 0
        %397 = vmatmul.mubr.bf16.gmra.mxu0 %v362
        %v398 = vpop.f32.mrf.mxu0
        %v399 = vadd.f32 %v334, %v398
        %v400 = vpop.f32.mrf.mxu0
        %v401 = vpop.f32.mrf.mxu0
        %v402 = vadd.f32 %v334, %v401
        %v403 = vpop.f32.mrf.mxu0
        %404 = vdwg.mxu0
        %vm405 = vcmask 130048
        %406 = vst.msk [vmem:[%s226] sm:$0xff] %vm405, %v399
        %407 = vst.msk [vmem:[%s226 + $0x8] sm:$0xff] %vm405, %v402
        %s408 = sand.u32 %s134, 1
        %s409 = sand.u32 %s134, 1
        %s410 = smul.addr %s409, 16
        %s411 = scalar_lea.vmem [#allocation2], %s410
        // Predicated region
        $region41: #{tpu_custom_call.1} parent=39 // pred_check
          %p412 = pneg %p144
        $region42: #{tpu_custom_call.1} parent=39 // pred_check_branch
          %414 = sbr.rel (%p412) target = $region44
        $region43: #{tpu_custom_call.1} parent=39 // pred_region
          %s415 = smul.u32 2, %s16
          %s416 = ssub.s32 5, %s415
          %p417 = scmp.lt.s32.totalorder %s416, 2
          %s418 = scalar_select %p417, %s416, 2
          %s419 = smul.u32 128, %s418
          %p420 = scmp.ne.s32.totalorder 0, %s419
          %s421 = smul.addr %s415, 8
          %s422 = scalar_lea.vmem %s5, %s421
          // Predicated region
          $region45: #{tpu_custom_call.1} parent=43 // pred_check
            %p423 = pneg %p420
          $region46: #{tpu_custom_call.1} parent=43 // pred_check_branch
            %425 = sbr.rel (%p423) target = $region48
          $region47: #{tpu_custom_call.1} parent=43 // pred_region
            // Predicated region
            $region49: #{tpu_custom_call.1} parent=47 // pred_check
              _
            $region50: #{tpu_custom_call.1} parent=47 // pred_check_branch
              %427 = sbr.rel (0) target = $region52
            $region51: #{tpu_custom_call.1} parent=47 // pred_region
              // Predicated region
              $region71: #{tpu_custom_call.1} parent=51 // pred_check
                _
              $region72: #{tpu_custom_call.1} parent=51 // pred_check_branch
                %479 = sbr.rel (0) target = $region74
              $region73: #{tpu_custom_call.1} parent=51 // pred_region
                %s480 = sshrl.u32 %s418, 1
                // While loop
                $region75: #{tpu_custom_call.1} parent=73 // loop_pre_header
                  _
                $region76: #{tpu_custom_call.1} parent=73 // loop_header
                  %s482 = sphi 0, %s484
                  %p483 = scmp.ge.s32.totalorder %s482, %s480
                  %s487 = sphi 0, %s496
                  %s488 = sphi %s411, %s499
                  %s489 = sphi %s422, %s500
                $region77: #{tpu_custom_call.1} parent=73 // loop_header_branch
                  %486 = sbr.rel (%p483) target = $region81
                $region78: #{tpu_custom_call.1} parent=73 // loop_body
                  %v490 = vld [vmem:[%s488] sm:$0xff]
                  %491 = vst [vmem:[%s489] sm:$0xff] %v490
                  %v492 = vld [vmem:[%s488 + $0x8] sm:$0xff]
                  %493 = vst [vmem:[%s489 + $0x8] sm:$0xff] %v492
                  %s494 = sadd.s32 1, %s487
                  %p495 = scmp.ge.s32.totalorder %s494, %s480
                  %s496 = scalar_select %p495, 0, %s494
                  %s497 = smul.u32 %s496, 16
                  %s498 = smul.u32 %s496, 16
                  %s499 = scalar_lea.vmem %s411, %s497 [#allocation2]
                  %s500 = scalar_lea.vmem %s422, %s498
                $region79: #{tpu_custom_call.1} parent=73 // loop_footer
                  %s484 = sadd.s32 %s482, 1
                $region80: #{tpu_custom_call.1} parent=73 // loop_footer_branch
                  %481 = sbr.rel target = $region76
                $region81: #{tpu_custom_call.1} parent=73 // loop_exit
                  _
                %s501 = sshrl.u32 %s418, 1
                %s502 = sand.u32 %s418, 1
                %s503 = smul.u32 %s501, 2
                %s504 = smul.u32 8, %s503
                %s505 = scalar_lea.vmem %s411, %s504 [#allocation2]
                %s506 = smul.u32 8, %s503
                %s507 = scalar_lea.vmem %s422, %s506
                // While loop
                $region82: #{tpu_custom_call.1} parent=73 // loop_pre_header
                  _
                $region83: #{tpu_custom_call.1} parent=73 // loop_header
                  %s509 = sphi 0, %s511
                  %p510 = scmp.ge.s32.totalorder %s509, %s502
                  %s514 = sphi 0, %s521
                  %s515 = sphi %s505, %s524
                  %s516 = sphi %s507, %s525
                $region84: #{tpu_custom_call.1} parent=73 // loop_header_branch
                  %513 = sbr.rel (%p510) target = $region88
                $region85: #{tpu_custom_call.1} parent=73 // loop_body
                  %v517 = vld [vmem:[%s515] sm:$0xff]
                  %518 = vst [vmem:[%s516] sm:$0xff] %v517
                  %s519 = sadd.s32 1, %s514
                  %p520 = scmp.ge.s32.totalorder %s519, %s502
                  %s521 = scalar_select %p520, 0, %s519
                  %s522 = smul.u32 %s521, 8
                  %s523 = smul.u32 %s521, 8
                  %s524 = scalar_lea.vmem %s505, %s522 [#allocation2]
                  %s525 = scalar_lea.vmem %s507, %s523
                $region86: #{tpu_custom_call.1} parent=73 // loop_footer
                  %s511 = sadd.s32 %s509, 1
                $region87: #{tpu_custom_call.1} parent=73 // loop_footer_branch
                  %508 = sbr.rel target = $region83
                $region88: #{tpu_custom_call.1} parent=73 // loop_exit
                  _
              $region74: #{tpu_custom_call.1} parent=51 // pred_fallthru
                _
              // Predicated region
              $region89: #{tpu_custom_call.1} parent=51 // pred_check
                _
              $region90: #{tpu_custom_call.1} parent=51 // pred_check_branch
                %527 = sbr.rel target = $region92
              $region91: #{tpu_custom_call.1} parent=51 // pred_region
                _
              $region92: #{tpu_custom_call.1} parent=51 // pred_fallthru
                _
            $region52: #{tpu_custom_call.1} parent=47 // pred_fallthru
              _
            // Predicated region
            $region53: #{tpu_custom_call.1} parent=47 // pred_check
              _
            $region54: #{tpu_custom_call.1} parent=47 // pred_check_branch
              %429 = sbr.rel target = $region56
            $region55: #{tpu_custom_call.1} parent=47 // pred_region
              %s431 = ssub.s32 256, 1
              %s432 = sshrl.u32 %s418, 1
              // While loop
              $region57: #{tpu_custom_call.1} parent=55 // loop_pre_header
                _
              $region58: #{tpu_custom_call.1} parent=55 // loop_header
                %s434 = sphi 0, %s436
                %p435 = scmp.ge.s32.totalorder %s434, %s432
                %s439 = sphi 0, %s448
                %s440 = sphi %s411, %s451
                %s441 = sphi %s422, %s452
              $region59: #{tpu_custom_call.1} parent=55 // loop_header_branch
                %438 = sbr.rel (%p435) target = $region63
              $region60: #{tpu_custom_call.1} parent=55 // loop_body
                %v442 = vld [vmem:[%s440] sm:%s431]
                %443 = vst [vmem:[%s441] sm:%s431] %v442
                %v444 = vld [vmem:[%s440 + $0x8] sm:%s431]
                %445 = vst [vmem:[%s441 + $0x8] sm:%s431] %v444
                %s446 = sadd.s32 1, %s439
                %p447 = scmp.ge.s32.totalorder %s446, %s432
                %s448 = scalar_select %p447, 0, %s446
                %s449 = smul.u32 %s448, 16
                %s450 = smul.u32 %s448, 16
                %s451 = scalar_lea.vmem %s411, %s449 [#allocation2]
                %s452 = scalar_lea.vmem %s422, %s450
              $region61: #{tpu_custom_call.1} parent=55 // loop_footer
                %s436 = sadd.s32 %s434, 1
              $region62: #{tpu_custom_call.1} parent=55 // loop_footer_branch
                %433 = sbr.rel target = $region58
              $region63: #{tpu_custom_call.1} parent=55 // loop_exit
                _
              %s453 = sshrl.u32 %s418, 1
              %s454 = sand.u32 %s418, 1
              %s455 = smul.u32 %s453, 2
              %s456 = smul.u32 8, %s455
              %s457 = scalar_lea.vmem %s411, %s456 [#allocation2]
              %s458 = smul.u32 8, %s455
              %s459 = scalar_lea.vmem %s422, %s458
              // While loop
              $region64: #{tpu_custom_call.1} parent=55 // loop_pre_header
                _
              $region65: #{tpu_custom_call.1} parent=55 // loop_header
                %s461 = sphi 0, %s463
                %p462 = scmp.ge.s32.totalorder %s461, %s454
                %s466 = sphi 0, %s473
                %s467 = sphi %s457, %s476
                %s468 = sphi %s459, %s477
              $region66: #{tpu_custom_call.1} parent=55 // loop_header_branch
                %465 = sbr.rel (%p462) target = $region70
              $region67: #{tpu_custom_call.1} parent=55 // loop_body
                %v469 = vld [vmem:[%s467] sm:%s431]
                %470 = vst [vmem:[%s468] sm:%s431] %v469
                %s471 = sadd.s32 1, %s466
                %p472 = scmp.ge.s32.totalorder %s471, %s454
                %s473 = scalar_select %p472, 0, %s471
                %s474 = smul.u32 %s473, 8
                %s475 = smul.u32 %s473, 8
                %s476 = scalar_lea.vmem %s457, %s474 [#allocation2]
                %s477 = scalar_lea.vmem %s459, %s475
              $region68: #{tpu_custom_call.1} parent=55 // loop_footer
                %s463 = sadd.s32 %s461, 1
              $region69: #{tpu_custom_call.1} parent=55 // loop_footer_branch
                %460 = sbr.rel target = $region65
              $region70: #{tpu_custom_call.1} parent=55 // loop_exit
                _
            $region56: #{tpu_custom_call.1} parent=47 // pred_fallthru
              _
          $region48: #{tpu_custom_call.1} parent=43 // pred_fallthru
            _
          %528 = vnop
        $region44: #{tpu_custom_call.1} parent=39 // pred_fallthru
          _
      $region40: #{tpu_custom_call.1} parent=5 // pred_fallthru
        _
      %p529 = scmp.le.s32.totalorder 2, %s11
      // Predicated region
      $region93: #{tpu_custom_call.1} parent=5 // pred_check
        %p530 = pneg %p529
      $region94: #{tpu_custom_call.1} parent=5 // pred_check_branch
        %532 = sbr.rel (%p530) target = $region96
      $region95: #{tpu_custom_call.1} parent=5 // pred_region
        %s533 = ssub.s32 %s11, 2
        // Predicated region
        $region97: #{tpu_custom_call.1} parent=95 // pred_check
          %p534 = pneg %p150
        $region98: #{tpu_custom_call.1} parent=95 // pred_check_branch
          %536 = sbr.rel (%p534) target = $region100
        $region99: #{tpu_custom_call.1} parent=95 // pred_region
          %s537 = sand.u32 %s135, 1
          %s538 = sand.u32 %s135, 1
          %s539 = smul.addr %s538, 16
          %s540 = scalar_lea.vmem [#allocation2], %s539
        $region100: #{tpu_custom_call.1} parent=95 // pred_fallthru
          _
      $region96: #{tpu_custom_call.1} parent=5 // pred_fallthru
        _
    $region6: #{tpu_custom_call.1} parent=1 // loop_footer
      %s15 = sadd.s32 1, %s11
    $region7: #{tpu_custom_call.1} parent=1 // loop_footer_branch
      %10 = sbr.rel target = $region3
    $region8: #{tpu_custom_call.1} parent=1 // loop_exit
      _

</llo_original>
